<compile_context>
chip_gen: v7x
topology: tpu7x:2x2x1
jax: 0.10.0
libtpu: 0.0.40
codegen_flags: <defaults>
</compile_context>

<pallas_src>
import jax
import jax.numpy as jnp
from jax import lax
from jax.experimental import pallas as pl
from jax.experimental.pallas import tpu as pltpu


def _round_up(a, b):
    return (a + b - 1) // b * b


# ---------------------------- Pallas kernels ----------------------------

def _conv_bn_relu_kernel(pT_ref, wT_ref, scale_ref, shift_ref, out_ref):
    # out[Cout, TILE_M] = relu( (W[Cout,K] @ patches^T[K,TILE_M]) * scale + shift )
    y = jnp.dot(wT_ref[...], pT_ref[...], preferred_element_type=jnp.float32)
    y = y * scale_ref[...] + shift_ref[...]          # f32 epilogue (v5e-friendly)
    out_ref[...] = jnp.maximum(y, 0.0)


def _conv_bn_relu_res_kernel(pT_ref, wT_ref, scale_ref, shift_ref, res_ref, out_ref):
    # residual variant: relu( bn(conv(x)) + x )   (residual added before ReLU,
    # matching the previous implementation's ConvNorm3D semantics)
    y = jnp.dot(wT_ref[...], pT_ref[...], preferred_element_type=jnp.float32)
    y = y * scale_ref[...] + shift_ref[...] + res_ref[...]
    out_ref[...] = jnp.maximum(y, 0.0)


def _bilstm_kernel(x_ref, wih_ref, whh_f_ref, whh_b_ref, b_ref, outf_ref, outb_ref):
    # x_ref:   [T*B, D]   (time-major rows: row = t*B + b)
    # wih_ref: [D, 8H]    = [Wih_f^T | Wih_b^T]
    # whh_*:   [H, 4H]
    # b_ref:   [1, 8H]    = [bih_f+bhh_f | bih_b+bhh_b]
    # outf/outb: [T, B, H]
    T, B, H = outf_ref.shape

    # Hoisted input projection: one batched MXU matmul for both directions.
    gin = jnp.dot(x_ref[...], wih_ref[...],
                  preferred_element_type=jnp.float32) + b_ref[...]   # [T*B, 8H]

    def gates_to_hc(g, c):
        i = jax.nn.sigmoid(g[:, 0:H])
        f = jax.nn.sigmoid(g[:, H:2 * H])
        gg = jnp.tanh(g[:, 2 * H:3 * H])
        o = jax.nn.sigmoid(g[:, 3 * H:4 * H])
        c_new = f * c + i * gg
        h_new = o * jnp.tanh(c_new)
        return h_new, c_new

    zeros = jnp.zeros((B, H), jnp.float32)
    hf, cf, hb, cb = zeros, zeros, zeros, zeros

    # Fully unrolled (T is small & static); fwd/bwd interleaved so the two
    # independent recurrent dot chains can overlap in the schedule.
    for k in range(T):
        tb = T - 1 - k
        gf = gin[k * B:(k + 1) * B, 0:4 * H] + jnp.dot(
            hf, whh_f_ref[...], preferred_element_type=jnp.float32)
        gb = gin[tb * B:(tb + 1) * B, 4 * H:8 * H] + jnp.dot(
            hb, whh_b_ref[...], preferred_element_type=jnp.float32)
        hf, cf = gates_to_hc(gf, cf)
        hb, cb = gates_to_hc(gb, cb)
        outf_ref[k] = hf
        outb_ref[tb] = hb


# ---------------------------- wrappers (glue) ----------------------------

def _im2col_T(x, k, stride):
    """x: [B, Cin, D, H, W] (NCDHW).  Returns patches^T [Cin*k^3, M] and (Do,Ho,Wo)."""
    B, Cin, Din, Hin, Win = x.shape
    kd = kh = kw = k
    sd, sh, sw = stride
    pd, ph, pw = kd // 2, kh // 2, kw // 2
    Do = (Din + 2 * pd - kd) // sd + 1
    Ho = (Hin + 2 * ph - kh) // sh + 1
    Wo = (Win + 2 * pw - kw) // sw + 1

    xp = jnp.pad(x, ((0, 0), (0, 0), (pd, pd), (ph, ph), (pw, pw)))
    slabs = []
    for a in range(kd):
        for b in range(kh):
            for c in range(kw):
                slabs.append(xp[:, :,
                                a:a + sd * (Do - 1) + 1:sd,
                                b:b + sh * (Ho - 1) + 1:sh,
                                c:c + sw * (Wo - 1) + 1:sw])
    taps = jnp.stack(slabs, axis=0)                 # [K3, B, Cin, Do, Ho, Wo]
    pT = jnp.transpose(taps, (2, 0, 1, 3, 4, 5))    # [Cin, K3, B, Do, Ho, Wo]
    pT = pT.reshape(Cin * kd * kh * kw, B * Do * Ho * Wo)
    return pT, (Do, Ho, Wo)


def conv3d_bn_relu(x, w, bias, gamma, beta, mean, var, stride, residual, eps=1e-5):
    """x: [B, Cin, D, H, W] NCDHW.  w: [Cout, Cin, kd, kh, kw].  Returns NCDHW."""
    B, Cin, Din, Hin, Win = x.shape
    Cout = w.shape[0]
    k = w.shape[2]

    pT, (Do, Ho, Wo) = _im2col_T(x, k, stride)
    Kdim, M = pT.shape

    # Tile the lane-dense M axis; pad so blocks divide evenly.
    Kp = _round_up(Kdim, 16)                      # bf16 sublane packing
    M_lane = _round_up(M, 128)
    TILE_M = min(1024, M_lane)
    M_pad = _round_up(M, TILE_M)
    num_tiles = M_pad // TILE_M

    pT = jnp.pad(pT, ((0, Kp - Kdim), (0, M_pad - M))).astype(jnp.bfloat16)
    wT = jnp.pad(w.reshape(Cout, Kdim), ((0, 0), (0, Kp - Kdim))).astype(jnp.bfloat16)

    scale_v = (gamma / jnp.sqrt(var + eps)).astype(jnp.float32)          # [Cout]
    shift_v = (beta + (bias - mean) * scale_v).astype(jnp.float32)       # [Cout]
    scale = scale_v.reshape(Cout, 1)
    shift = shift_v.reshape(Cout, 1)

    pspec = pl.BlockSpec((Kp, TILE_M), lambda i: (0, i))
    wspec = pl.BlockSpec((Cout, Kp), lambda i: (0, 0))
    vspec = pl.BlockSpec((Cout, 1), lambda i: (0, 0))
    ospec = pl.BlockSpec((Cout, TILE_M), lambda i: (0, i))
    cparams = pltpu.CompilerParams(
        dimension_semantics=("parallel",),
        vmem_limit_bytes=32 * 1024 * 1024,   # safe on v5e (16MiB default) and v7x (64MiB phys)
    )

    if residual:
        assert Cin == Cout and tuple(stride) == (1, 1, 1), \
            "residual layers require Cin == Cout and unit stride"
        res = jnp.transpose(x, (1, 0, 2, 3, 4)).reshape(Cout, M).astype(jnp.float32)
        res = jnp.pad(res, ((0, 0), (0, M_pad - M)))
        out = pl.pallas_call(
            _conv_bn_relu_res_kernel,
            out_shape=jax.ShapeDtypeStruct((Cout, M_pad), jnp.float32),
            grid=(num_tiles,),
            in_specs=[pspec, wspec, vspec, vspec,
                      pl.BlockSpec((Cout, TILE_M), lambda i: (0, i))],
            out_specs=ospec,
            compiler_params=cparams,
        )(pT, wT, scale, shift, res)
    else:
        out = pl.pallas_call(
            _conv_bn_relu_kernel,
            out_shape=jax.ShapeDtypeStruct((Cout, M_pad), jnp.float32),
            grid=(num_tiles,),
            in_specs=[pspec, wspec, vspec, vspec],
            out_specs=ospec,
            compiler_params=cparams,
        )(pT, wT, scale, shift)

    out = out[:, :M].reshape(Cout, B, Do, Ho, Wo)
    return jnp.transpose(out, (1, 0, 2, 3, 4))      # back to NCDHW


def bilstm(x_btd, p):
    """x_btd: [B, T, D].  Returns [B, T, 2H] (PyTorch bidirectional LSTM output)."""
    B, T, D = x_btd.shape
    H = p["whh_f"].shape[1]

    # time-major rows: row = t*B + b
    x_2d = jnp.transpose(x_btd, (1, 0, 2)).reshape(T * B, D).astype(jnp.float32)

    wih_cat = jnp.concatenate([p["wih_f"].T, p["wih_b"].T], axis=1)       # [D, 8H]
    b_cat = jnp.concatenate([p["bih_f"] + p["bhh_f"],
                             p["bih_b"] + p["bhh_b"]]).reshape(1, 8 * H)  # [1, 8H]

    vmem = pl.BlockSpec(memory_space=pltpu.MemorySpace.VMEM)
    out_f, out_b = pl.pallas_call(
        _bilstm_kernel,
        out_shape=(jax.ShapeDtypeStruct((T, B, H), jnp.float32),
                   jax.ShapeDtypeStruct((T, B, H), jnp.float32)),
        in_specs=[vmem] * 5,
        out_specs=(vmem, vmem),
    )(x_2d, wih_cat, p["whh_f"].T, p["whh_b"].T, b_cat)

    out = jnp.concatenate([out_f, out_b], axis=-1)   # [T, B, 2H]
    return jnp.transpose(out, (1, 0, 2))             # [B, T, 2H]


def build_encoder_params(key, num_init_filters=8, encoder_n_convolutions=2,
                         encoder_embedding_dim=16):
    # Re-create the ConvNorm3D layer list exactly as Encoder3D.__init__ does.
    layer_specs = []
    in_c, out_c = 3, num_init_filters
    for i in range(encoder_n_convolutions):
        k0 = 5 if i == 0 else 3
        layer_specs += [
            (in_c, out_c, k0, (1, 2, 2), False),
            (out_c, out_c, 3, (1, 1, 1), True),
            (out_c, out_c, 3, (1, 1, 1), True),
        ]
        if i == encoder_n_convolutions - 1:
            layer_specs += [(out_c, out_c, 3, (1, 3, 3), False)]
        in_c = out_c
        out_c *= 2
    assert in_c == encoder_embedding_dim, "final conv channels must equal embedding dim"

    keys = jax.random.split(key, 2 * len(layer_specs) + 8)
    params = {"convs": [], "lstm": {}}
    ki = 0
    for (ci, co, k, stride, residual) in layer_specs:
        w = jax.random.normal(keys[ki], (co, ci, k, k, k), jnp.float32) * 0.05
        b = jax.random.normal(keys[ki + 1], (co,), jnp.float32) * 0.01
        ki += 2
        params["convs"].append({
            "w": w, "b": b,
            "gamma": jnp.ones((co,), jnp.float32),
            "beta": jnp.zeros((co,), jnp.float32),
            "mean": jnp.zeros((co,), jnp.float32),
            "var": jnp.ones((co,), jnp.float32),
            "stride": stride, "residual": residual,
        })

    D = encoder_embedding_dim
    H = D // 2
    rnd = lambda shape, k_: jax.random.normal(k_, shape, jnp.float32) * 0.1
    params["lstm"] = {
        "wih_f": rnd((4 * H, D), keys[ki + 0]), "whh_f": rnd((4 * H, H), keys[ki + 1]),
        "bih_f": rnd((4 * H,), keys[ki + 2]),   "bhh_f": rnd((4 * H,), keys[ki + 3]),
        "wih_b": rnd((4 * H, D), keys[ki + 4]), "whh_b": rnd((4 * H, H), keys[ki + 5]),
        "bih_b": rnd((4 * H,), keys[ki + 6]),   "bhh_b": rnd((4 * H,), keys[ki + 7]),
    }
    return params


def encoder3d_forward(x, input_lengths, params):
    """x: [B, 3, T, H, W] (NCDHW).  Returns [B, T, encoder_embedding_dim]."""
    del input_lengths  # reference only moves it to CPU; never consumed by the LSTM call
    for cp in params["convs"]:
        x = conv3d_bn_relu(x, cp["w"], cp["b"], cp["gamma"], cp["beta"],
                           cp["mean"], cp["var"], cp["stride"], cp["residual"])
    # x: [B, C, T, 1, 1] -> permute(0,2,1,3,4).squeeze(4).squeeze(3) -> [B, T, C]
    B, C, T, Ho, Wo = x.shape
    assert Ho == 1 and Wo == 1, f"spatial dims must be reduced to 1x1, got {Ho}x{Wo}"
    x = jnp.transpose(x, (0, 2, 1, 3, 4)).reshape(B, T, C)
    return bilstm(x, params["lstm"])


if __name__ == "__main__":
    key = jax.random.PRNGKey(0)
    kx, kp = jax.random.split(key)

    # hparams: num_init_filters=8, encoder_n_convolutions=2, encoder_embedding_dim=16
    B, T, HW = 2, 8, 12
    x = jax.random.normal(kx, (B, 3, T, HW, HW), jnp.float32)   # NCDHW video input
    input_lengths = jnp.array([T, T], jnp.int32)

    params = build_encoder_params(kp, num_init_filters=8,
                                  encoder_n_convolutions=2,
                                  encoder_embedding_dim=16)

    out = encoder3d_forward(x, input_lengths, params)
    out = jax.block_until_ready(out)
    assert out.shape == (B, T, 16), out.shape
    assert bool(jnp.all(jnp.isfinite(out)))
    print("KERNEL_OK")
</pallas_src>

<mosaic_0001>
module attributes {stable_mosaic.version = 11 : i64} {
  func.func @_conv_bn_relu_kernel(%arg0: i32, %arg1: memref<384x640xbf16, #tpu.memory_space<vmem>>, %arg2: memref<8x384xbf16, #tpu.memory_space<vmem>>, %arg3: memref<8x1xf32, #tpu.memory_space<vmem>>, %arg4: memref<8x1xf32, #tpu.memory_space<vmem>>, %arg5: memref<8x640xf32, #tpu.memory_space<vmem>>) attributes {dimension_semantics = [#tpu.dimension_semantics<parallel>], iteration_bounds = array<i64: 1>, scalar_prefetch = 0 : i64, scratch_operands = 0 : i64, tpu.core_type = #tpu.core_type<tc>, window_params = [{transform_indices = @transform_0, window_bounds = array<i64: 384, 640>}, {pipeline_mode = #tpu.pipeline_mode<synchronous>, transform_indices = @transform_1, window_bounds = array<i64: 8, 384>}, {pipeline_mode = #tpu.pipeline_mode<synchronous>, transform_indices = @transform_2, window_bounds = array<i64: 8, 1>}, {pipeline_mode = #tpu.pipeline_mode<synchronous>, transform_indices = @transform_3, window_bounds = array<i64: 8, 1>}, {transform_indices = @transform_4, window_bounds = array<i64: 8, 640>}]} {
    %c0 = arith.constant 0 : index
    %c0_0 = arith.constant 0 : index
    %0 = vector.load %arg2[%c0, %c0_0] : memref<8x384xbf16, #tpu.memory_space<vmem>>, vector<8x384xbf16>
    %c0_1 = arith.constant 0 : index
    %c0_2 = arith.constant 0 : index
    %1 = vector.load %arg1[%c0_1, %c0_2] : memref<384x640xbf16, #tpu.memory_space<vmem>>, vector<384x640xbf16>
    %cst = arith.constant dense<0.000000e+00> : vector<8x640xf32>
    %2 = tpu.matmul %0, %1, %cst {dimension_numbers = #tpu.dot_dimension_numbers<[1], [0], [0], [1], [0, 0, 1, 1], [], []>} : vector<8x384xbf16>, vector<384x640xbf16>, vector<8x640xf32> -> vector<8x640xf32>
    %c0_3 = arith.constant 0 : index
    %c0_4 = arith.constant 0 : index
    %3 = vector.load %arg3[%c0_3, %c0_4] : memref<8x1xf32, #tpu.memory_space<vmem>>, vector<8x1xf32>
    %4 = vector.broadcast %3 : vector<8x1xf32> to vector<8x640xf32>
    %5 = arith.mulf %2, %4 : vector<8x640xf32>
    %c0_5 = arith.constant 0 : index
    %c0_6 = arith.constant 0 : index
    %6 = vector.load %arg4[%c0_5, %c0_6] : memref<8x1xf32, #tpu.memory_space<vmem>>, vector<8x1xf32>
    %7 = vector.broadcast %6 : vector<8x1xf32> to vector<8x640xf32>
    %8 = arith.addf %5, %7 : vector<8x640xf32>
    %cst_7 = arith.constant 0.000000e+00 : f32
    %9 = vector.broadcast %cst_7 : f32 to vector<8x640xf32>
    %10 = arith.maximumf %8, %9 : vector<8x640xf32>
    %c0_8 = arith.constant 0 : index
    %c0_9 = arith.constant 0 : index
    %11 = vector.load %arg5[%c0_8, %c0_9] : memref<8x640xf32, #tpu.memory_space<vmem>>, vector<8x640xf32>
    tpu.vector_store %arg5[%c0_8, %c0_9], %10 {strides = array<i32>} : memref<8x640xf32, #tpu.memory_space<vmem>>, vector<8x640xf32>,
    return
  }
  func.func @transform_0(%arg0: i32) -> (i32, i32) {
    %c0_i32 = arith.constant 0 : i32
    %c0_i32_0 = arith.constant 0 : i32
    return %c0_i32, %arg0 : i32, i32
  }
  func.func @transform_1(%arg0: i32) -> (i32, i32) {
    %c0_i32 = arith.constant 0 : i32
    %c0_i32_0 = arith.constant 0 : i32
    %c0_i32_1 = arith.constant 0 : i32
    return %c0_i32, %c0_i32_0 : i32, i32
  }
  func.func @transform_2(%arg0: i32) -> (i32, i32) {
    %c0_i32 = arith.constant 0 : i32
    %c0_i32_0 = arith.constant 0 : i32
    %c0_i32_1 = arith.constant 0 : i32
    return %c0_i32, %c0_i32_0 : i32, i32
  }
  func.func @transform_3(%arg0: i32) -> (i32, i32) {
    %c0_i32 = arith.constant 0 : i32
    %c0_i32_0 = arith.constant 0 : i32
    %c0_i32_1 = arith.constant 0 : i32
    return %c0_i32, %c0_i32_0 : i32, i32
  }
  func.func @transform_4(%arg0: i32) -> (i32, i32) {
    %c0_i32 = arith.constant 0 : i32
    %c0_i32_0 = arith.constant 0 : i32
    return %c0_i32, %arg0 : i32, i32
  }
}

</mosaic_0001>

<llo_original>
// kernel: tpu_custom_call.1
$region0: #{tpu_custom_call.1}
  #allocation0 [shape = 'u32[]', space=smem, size = 0x4, offset = 0x4, fixed_abs, tag = 'smem constant byte address 0x4 - core index']
  #allocation1 [shape = 'u32[144,128]{1,0:T(1,128)}', space=vmem, size = 0x12000, scoped, tag = 'internal scratch']
  %s0 = inlined_call_operand.hbm [shape: bf16[384,640], index: 0, kind: input, shape index: {}]
  %s1 = inlined_call_operand.vmem [shape: bf16[8,384], index: 1, kind: input, shape index: {}]
  %s2 = inlined_call_operand.vmem [shape: f32[8,1], index: 2, kind: input, shape index: {}]
  %s3 = inlined_call_operand.vmem [shape: f32[8,1], index: 3, kind: input, shape index: {}]
  %s4 = inlined_call_operand.hbm [shape: f32[8,640], index: 4, kind: output, shape index: {}]
  %s5 = sld [smem:[#allocation0]]
  $region30: #{tpu_custom_call.1} parent=0
    _
  %s7 = ssub.s32 1, %s5
  %s8 = scalar_select 0, %s7, %s5
  $region1: #{tpu_custom_call.1} parent=0
    #allocation2 [shape = 'u8[491520]{0}', space=vmem, size = 0x78000, scoped, tag = 'input window, operand 0, single buffered']
    #allocation3 [shape = 's32[1]{0}', space=sflag, size = 0x4, scoped, tag = 'scoped memory for tpu_custom_call.1']
    #allocation4 [shape = 's32[1]{0}', space=sflag, size = 0x4, scoped, tag = 'scoped memory for tpu_custom_call.1']
    #allocation5 [shape = 'u8[20480]{0}', space=vmem, size = 0x5000, scoped, tag = 'output window, operand 0, single buffered']
    %9 = vsyncpa [#allocation3], 0
    %10 = vsyncpa [#allocation4], 0
    // Predicated region
    $region2: #{tpu_custom_call.1} parent=1 // pred_check
      _
    $region3: #{tpu_custom_call.1} parent=1 // pred_check_branch
      %12 = sbr.rel (0) target = $region5
    $region4: #{tpu_custom_call.1} parent=1 // pred_region
      %s14 = ssub.s32 15360, 15360
      %15 = vsyncadd [#allocation3], %s14
      %s16 = sshll.u32 [#allocation2], 4
      %s17 = int_to_ptr.vmem [resolvable:$true] %s16
      %22 = dma.hbm_to_vmem [thread:$0]  %s0, 15360, %s17, [#allocation3], 320, 320, 20
    $region5: #{tpu_custom_call.1} parent=1 // pred_fallthru
      _
    // Predicated region
    $region6: #{tpu_custom_call.1} parent=1 // pred_check
      _
    $region7: #{tpu_custom_call.1} parent=1 // pred_check_branch
      %24 = sbr.rel (0) target = $region9
    $region8: #{tpu_custom_call.1} parent=1 // pred_region
      _
    $region9: #{tpu_custom_call.1} parent=1 // pred_fallthru
      _
    // Predicated region
    $region10: #{tpu_custom_call.1} parent=1 // pred_check
      _
    $region11: #{tpu_custom_call.1} parent=1 // pred_check_branch
      %26 = sbr.rel (0) target = $region13
    $region12: #{tpu_custom_call.1} parent=1 // pred_region
      _
    $region13: #{tpu_custom_call.1} parent=1 // pred_fallthru
      _
    // Predicated region
    $region14: #{tpu_custom_call.1} parent=1 // pred_check
      _
    $region15: #{tpu_custom_call.1} parent=1 // pred_check_branch
      %28 = sbr.rel (0) target = $region17
    $region16: #{tpu_custom_call.1} parent=1 // pred_region
      _
    $region17: #{tpu_custom_call.1} parent=1 // pred_fallthru
      _
    // Predicated region
    $region18: #{tpu_custom_call.1} parent=1 // pred_check
      _
    $region19: #{tpu_custom_call.1} parent=1 // pred_check_branch
      %30 = sbr.rel (0) target = $region21
    $region20: #{tpu_custom_call.1} parent=1 // pred_region
      %31 = dma.done [#allocation3], 15360
    $region21: #{tpu_custom_call.1} parent=1 // pred_fallthru
      _
    %v33 = vld [vmem:[%s1] sm:$0xff]
    %v34 = vld [vmem:[%s1 + $0x8] sm:$0xf]
    %v35 = vld [vmem:[#allocation2] sm:$0xff]
    %v36 = vld [vmem:[#allocation2 + $0x8] sm:$0xff]
    %v37 = vld [vmem:[#allocation2 + $0x10] sm:$0xf]
    %v38 = vld [vmem:[#allocation2 + $0x14] sm:$0xff]
    %v39 = vld [vmem:[#allocation2 + $0x1c] sm:$0xff]
    %v40 = vld [vmem:[#allocation2 + $0x24] sm:$0xf]
    %v41 = vld [vmem:[#allocation2 + $0x28] sm:$0xff]
    %v42 = vld [vmem:[#allocation2 + $0x30] sm:$0xff]
    %v43 = vld [vmem:[#allocation2 + $0x38] sm:$0xf]
    %v44 = vld [vmem:[#allocation2 + $0x3c] sm:$0xff]
    %v45 = vld [vmem:[#allocation2 + $0x44] sm:$0xff]
    %v46 = vld [vmem:[#allocation2 + $0x4c] sm:$0xf]
    %v47 = vld [vmem:[#allocation2 + $0x50] sm:$0xff]
    %v48 = vld [vmem:[#allocation2 + $0x58] sm:$0xff]
    %v49 = vld [vmem:[#allocation2 + $0x60] sm:$0xf]
    %v50 = vld [vmem:[#allocation2 + $0x64] sm:$0xff]
    %v51 = vld [vmem:[#allocation2 + $0x6c] sm:$0xff]
    %v52 = vld [vmem:[#allocation2 + $0x74] sm:$0xf]
    %v53 = vld [vmem:[#allocation2 + $0x78] sm:$0xff]
    %v54 = vld [vmem:[#allocation2 + $0x80] sm:$0xff]
    %v55 = vld [vmem:[#allocation2 + $0x88] sm:$0xf]
    %v56 = vld [vmem:[#allocation2 + $0x8c] sm:$0xff]
    %v57 = vld [vmem:[#allocation2 + $0x94] sm:$0xff]
    %v58 = vld [vmem:[#allocation2 + $0x9c] sm:$0xf]
    %v59 = vld [vmem:[#allocation2 + $0xa0] sm:$0xff]
    %v60 = vld [vmem:[#allocation2 + $0xa8] sm:$0xff]
    %v61 = vld [vmem:[#allocation2 + $0xb0] sm:$0xf]
    %v62 = vld [vmem:[#allocation2 + $0xb4] sm:$0xff]
    %v63 = vld [vmem:[#allocation2 + $0xbc] sm:$0xff]
    %v64 = vld [vmem:[#allocation2 + $0xc4] sm:$0xf]
    %v65 = vld [vmem:[#allocation2 + $0xc8] sm:$0xff]
    %v66 = vld [vmem:[#allocation2 + $0xd0] sm:$0xff]
    %v67 = vld [vmem:[#allocation2 + $0xd8] sm:$0xf]
    %v68 = vld [vmem:[#allocation2 + $0xdc] sm:$0xff]
    %v69 = vld [vmem:[#allocation2 + $0xe4] sm:$0xff]
    %v70 = vld [vmem:[#allocation2 + $0xec] sm:$0xf]
    %v71 = vld [vmem:[#allocation2 + $0xf0] sm:$0xff]
    %v72 = vld [vmem:[#allocation2 + $0xf8] sm:$0xff]
    %v73 = vld [vmem:[#allocation2 + $0x100] sm:$0xf]
    %v74 = vld [vmem:[#allocation2 + $0x104] sm:$0xff]
    %v75 = vld [vmem:[#allocation2 + $0x10c] sm:$0xff]
    %v76 = vld [vmem:[#allocation2 + $0x114] sm:$0xf]
    %v77 = vld [vmem:[#allocation2 + $0x118] sm:$0xff]
    %v78 = vld [vmem:[#allocation2 + $0x120] sm:$0xff]
    %v79 = vld [vmem:[#allocation2 + $0x128] sm:$0xf]
    %v80 = vld [vmem:[#allocation2 + $0x12c] sm:$0xff]
    %v81 = vld [vmem:[#allocation2 + $0x134] sm:$0xff]
    %v82 = vld [vmem:[#allocation2 + $0x13c] sm:$0xf]
    %v83 = vld [vmem:[#allocation2 + $0x140] sm:$0xff]
    %v84 = vld [vmem:[#allocation2 + $0x148] sm:$0xff]
    %v85 = vld [vmem:[#allocation2 + $0x150] sm:$0xf]
    %v86 = vld [vmem:[#allocation2 + $0x154] sm:$0xff]
    %v87 = vld [vmem:[#allocation2 + $0x15c] sm:$0xff]
    %v88 = vld [vmem:[#allocation2 + $0x164] sm:$0xf]
    %v89 = vld [vmem:[#allocation2 + $0x168] sm:$0xff]
    %v90 = vld [vmem:[#allocation2 + $0x170] sm:$0xff]
    %v91 = vld [vmem:[#allocation2 + $0x178] sm:$0xf]
    %v92 = vld [vmem:[#allocation2 + $0x17c] sm:$0xff]
    %v93 = vld [vmem:[#allocation2 + $0x184] sm:$0xff]
    %v94 = vld [vmem:[#allocation2 + $0x18c] sm:$0xf]
    %v95 = vld [vmem:[#allocation2 + $0x190] sm:$0xff]
    %v96 = vld [vmem:[#allocation2 + $0x198] sm:$0xff]
    %v97 = vld [vmem:[#allocation2 + $0x1a0] sm:$0xf]
    %v98 = vld [vmem:[#allocation2 + $0x1a4] sm:$0xff]
    %v99 = vld [vmem:[#allocation2 + $0x1ac] sm:$0xff]
    %v100 = vld [vmem:[#allocation2 + $0x1b4] sm:$0xf]
    %v101 = vld [vmem:[#allocation2 + $0x1b8] sm:$0xff]
    %v102 = vld [vmem:[#allocation2 + $0x1c0] sm:$0xff]
    %v103 = vld [vmem:[#allocation2 + $0x1c8] sm:$0xf]
    %v104 = vld [vmem:[#allocation2 + $0x1cc] sm:$0xff]
    %v105 = vld [vmem:[#allocation2 + $0x1d4] sm:$0xff]
    %v106 = vld [vmem:[#allocation2 + $0x1dc] sm:$0xf]
    %v107 = vld [vmem:[#allocation2 + $0x1e0] sm:$0xff]
    %v108 = vld [vmem:[#allocation2 + $0x1e8] sm:$0xff]
    %v109 = vld [vmem:[#allocation2 + $0x1f0] sm:$0xf]
    %v110 = vld [vmem:[#allocation2 + $0x1f4] sm:$0xff]
    %v111 = vld [vmem:[#allocation2 + $0x1fc] sm:$0xff]
    %v112 = vld [vmem:[#allocation2 + $0x204] sm:$0xf]
    %v113 = vld [vmem:[#allocation2 + $0x208] sm:$0xff]
    %v114 = vld [vmem:[#allocation2 + $0x210] sm:$0xff]
    %v115 = vld [vmem:[#allocation2 + $0x218] sm:$0xf]
    %v116 = vld [vmem:[#allocation2 + $0x21c] sm:$0xff]
    %v117 = vld [vmem:[#allocation2 + $0x224] sm:$0xff]
    %v118 = vld [vmem:[#allocation2 + $0x22c] sm:$0xf]
    %v119 = vld [vmem:[#allocation2 + $0x230] sm:$0xff]
    %v120 = vld [vmem:[#allocation2 + $0x238] sm:$0xff]
    %v121 = vld [vmem:[#allocation2 + $0x240] sm:$0xf]
    %v122 = vld [vmem:[#allocation2 + $0x244] sm:$0xff]
    %v123 = vld [vmem:[#allocation2 + $0x24c] sm:$0xff]
    %v124 = vld [vmem:[#allocation2 + $0x254] sm:$0xf]
    %v125 = vld [vmem:[#allocation2 + $0x258] sm:$0xff]
    %v126 = vld [vmem:[#allocation2 + $0x260] sm:$0xff]
    %v127 = vld [vmem:[#allocation2 + $0x268] sm:$0xf]
    %v128 = vld [vmem:[#allocation2 + $0x26c] sm:$0xff]
    %v129 = vld [vmem:[#allocation2 + $0x274] sm:$0xff]
    %v130 = vld [vmem:[#allocation2 + $0x27c] sm:$0xf]
    %v131 = vld [vmem:[#allocation2 + $0x280] sm:$0xff]
    %v132 = vld [vmem:[#allocation2 + $0x288] sm:$0xff]
    %v133 = vld [vmem:[#allocation2 + $0x290] sm:$0xf]
    %v134 = vld [vmem:[#allocation2 + $0x294] sm:$0xff]
    %v135 = vld [vmem:[#allocation2 + $0x29c] sm:$0xff]
    %v136 = vld [vmem:[#allocation2 + $0x2a4] sm:$0xf]
    %v137 = vld [vmem:[#allocation2 + $0x2a8] sm:$0xff]
    %v138 = vld [vmem:[#allocation2 + $0x2b0] sm:$0xff]
    %v139 = vld [vmem:[#allocation2 + $0x2b8] sm:$0xf]
    %v140 = vld [vmem:[#allocation2 + $0x2bc] sm:$0xff]
    %v141 = vld [vmem:[#allocation2 + $0x2c4] sm:$0xff]
    %v142 = vld [vmem:[#allocation2 + $0x2cc] sm:$0xf]
    %v143 = vld [vmem:[#allocation2 + $0x2d0] sm:$0xff]
    %v144 = vld [vmem:[#allocation2 + $0x2d8] sm:$0xff]
    %v145 = vld [vmem:[#allocation2 + $0x2e0] sm:$0xf]
    %v146 = vld [vmem:[#allocation2 + $0x2e4] sm:$0xff]
    %v147 = vld [vmem:[#allocation2 + $0x2ec] sm:$0xff]
    %v148 = vld [vmem:[#allocation2 + $0x2f4] sm:$0xf]
    %v149 = vld [vmem:[#allocation2 + $0x2f8] sm:$0xff]
    %v150 = vld [vmem:[#allocation2 + $0x300] sm:$0xff]
    %v151 = vld [vmem:[#allocation2 + $0x308] sm:$0xf]
    %v152 = vld [vmem:[#allocation2 + $0x30c] sm:$0xff]
    %v153 = vld [vmem:[#allocation2 + $0x314] sm:$0xff]
    %v154 = vld [vmem:[#allocation2 + $0x31c] sm:$0xf]
    %v155 = vld [vmem:[#allocation2 + $0x320] sm:$0xff]
    %v156 = vld [vmem:[#allocation2 + $0x328] sm:$0xff]
    %v157 = vld [vmem:[#allocation2 + $0x330] sm:$0xf]
    %v158 = vld [vmem:[#allocation2 + $0x334] sm:$0xff]
    %v159 = vld [vmem:[#allocation2 + $0x33c] sm:$0xff]
    %v160 = vld [vmem:[#allocation2 + $0x344] sm:$0xf]
    %v161 = vld [vmem:[#allocation2 + $0x348] sm:$0xff]
    %v162 = vld [vmem:[#allocation2 + $0x350] sm:$0xff]
    %v163 = vld [vmem:[#allocation2 + $0x358] sm:$0xf]
    %v164 = vld [vmem:[#allocation2 + $0x35c] sm:$0xff]
    %v165 = vld [vmem:[#allocation2 + $0x364] sm:$0xff]
    %v166 = vld [vmem:[#allocation2 + $0x36c] sm:$0xf]
    %v167 = vld [vmem:[#allocation2 + $0x370] sm:$0xff]
    %v168 = vld [vmem:[#allocation2 + $0x378] sm:$0xff]
    %v169 = vld [vmem:[#allocation2 + $0x380] sm:$0xf]
    %v170 = vld [vmem:[#allocation2 + $0x384] sm:$0xff]
    %v171 = vld [vmem:[#allocation2 + $0x38c] sm:$0xff]
    %v172 = vld [vmem:[#allocation2 + $0x394] sm:$0xf]
    %v173 = vld [vmem:[#allocation2 + $0x398] sm:$0xff]
    %v174 = vld [vmem:[#allocation2 + $0x3a0] sm:$0xff]
    %v175 = vld [vmem:[#allocation2 + $0x3a8] sm:$0xf]
    %v176 = vld [vmem:[#allocation2 + $0x3ac] sm:$0xff]
    %v177 = vld [vmem:[#allocation2 + $0x3b4] sm:$0xff]
    %v178 = vld [vmem:[#allocation2 + $0x3bc] sm:$0xf]
    %v181 = vunpack.c.l.b16 %v33
    %v182 = vunpack.c.h.b16 %v33
    %v183 = vunpack.c.l.b16 %v34
    %v184 = vpack.c.b16 %v181, %v181
    %v185 = vpack.c.b16 %v182, %v182
    %v186 = vpack.c.b16 %v183, %v183
    %v334 = vunpack.c.l.b16 %v35
    %v335 = vunpack.c.h.b16 %v35
    %v336 = vunpack.c.l.b16 %v36
    %v337 = vunpack.c.h.b16 %v36
    %v338 = vunpack.c.l.b16 %v37
    %v339 = vunpack.c.l.b16 %v38
    %v340 = vunpack.c.h.b16 %v38
    %v341 = vunpack.c.l.b16 %v39
    %v342 = vunpack.c.h.b16 %v39
    %v343 = vunpack.c.l.b16 %v40
    %v344 = vunpack.c.l.b16 %v41
    %v345 = vunpack.c.h.b16 %v41
    %v346 = vunpack.c.l.b16 %v42
    %v347 = vunpack.c.h.b16 %v42
    %v348 = vunpack.c.l.b16 %v43
    %v349 = vunpack.c.l.b16 %v44
    %v350 = vunpack.c.h.b16 %v44
    %v351 = vunpack.c.l.b16 %v45
    %v352 = vunpack.c.h.b16 %v45
    %v353 = vunpack.c.l.b16 %v46
    %v354 = vunpack.c.l.b16 %v47
    %v355 = vunpack.c.h.b16 %v47
    %v356 = vunpack.c.l.b16 %v48
    %v357 = vunpack.c.h.b16 %v48
    %v358 = vunpack.c.l.b16 %v49
    %v359 = vunpack.c.l.b16 %v50
    %v360 = vunpack.c.h.b16 %v50
    %v361 = vunpack.c.l.b16 %v51
    %v362 = vunpack.c.h.b16 %v51
    %v363 = vunpack.c.l.b16 %v52
    %v364 = vunpack.c.l.b16 %v53
    %v365 = vunpack.c.h.b16 %v53
    %v366 = vunpack.c.l.b16 %v54
    %v367 = vunpack.c.h.b16 %v54
    %v368 = vunpack.c.l.b16 %v55
    %v369 = vunpack.c.l.b16 %v56
    %v370 = vunpack.c.h.b16 %v56
    %v371 = vunpack.c.l.b16 %v57
    %v372 = vunpack.c.h.b16 %v57
    %v373 = vunpack.c.l.b16 %v58
    %v374 = vunpack.c.l.b16 %v59
    %v375 = vunpack.c.h.b16 %v59
    %v376 = vunpack.c.l.b16 %v60
    %v377 = vunpack.c.h.b16 %v60
    %v378 = vunpack.c.l.b16 %v61
    %v379 = vunpack.c.l.b16 %v62
    %v380 = vunpack.c.h.b16 %v62
    %v381 = vunpack.c.l.b16 %v63
    %v382 = vunpack.c.h.b16 %v63
    %v383 = vunpack.c.l.b16 %v64
    %v384 = vunpack.c.l.b16 %v65
    %v385 = vunpack.c.h.b16 %v65
    %v386 = vunpack.c.l.b16 %v66
    %v387 = vunpack.c.h.b16 %v66
    %v388 = vunpack.c.l.b16 %v67
    %v389 = vunpack.c.l.b16 %v68
    %v390 = vunpack.c.h.b16 %v68
    %v391 = vunpack.c.l.b16 %v69
    %v392 = vunpack.c.h.b16 %v69
    %v393 = vunpack.c.l.b16 %v70
    %v394 = vunpack.c.l.b16 %v71
    %v395 = vunpack.c.h.b16 %v71
    %v396 = vunpack.c.l.b16 %v72
    %v397 = vunpack.c.h.b16 %v72
    %v398 = vunpack.c.l.b16 %v73
    %v399 = vunpack.c.l.b16 %v74
    %v400 = vunpack.c.h.b16 %v74
    %v401 = vunpack.c.l.b16 %v75
    %v402 = vunpack.c.h.b16 %v75
    %v403 = vunpack.c.l.b16 %v76
    %v404 = vunpack.c.l.b16 %v77
    %v405 = vunpack.c.h.b16 %v77
    %v406 = vunpack.c.l.b16 %v78
    %v407 = vunpack.c.h.b16 %v78
    %v408 = vunpack.c.l.b16 %v79
    %v409 = vunpack.c.l.b16 %v80
    %v410 = vunpack.c.h.b16 %v80
    %v411 = vunpack.c.l.b16 %v81
    %v412 = vunpack.c.h.b16 %v81
    %v413 = vunpack.c.l.b16 %v82
    %v414 = vunpack.c.l.b16 %v83
    %v415 = vunpack.c.h.b16 %v83
    %v416 = vunpack.c.l.b16 %v84
    %v417 = vunpack.c.h.b16 %v84
    %v418 = vunpack.c.l.b16 %v85
    %v419 = vunpack.c.l.b16 %v86
    %v420 = vunpack.c.h.b16 %v86
    %v421 = vunpack.c.l.b16 %v87
    %v422 = vunpack.c.h.b16 %v87
    %v423 = vunpack.c.l.b16 %v88
    %v424 = vunpack.c.l.b16 %v89
    %v425 = vunpack.c.h.b16 %v89
    %v426 = vunpack.c.l.b16 %v90
    %v427 = vunpack.c.h.b16 %v90
    %v428 = vunpack.c.l.b16 %v91
    %v429 = vunpack.c.l.b16 %v92
    %v430 = vunpack.c.h.b16 %v92
    %v431 = vunpack.c.l.b16 %v93
    %v432 = vunpack.c.h.b16 %v93
    %v433 = vunpack.c.l.b16 %v94
    %v434 = vunpack.c.l.b16 %v95
    %v435 = vunpack.c.h.b16 %v95
    %v436 = vunpack.c.l.b16 %v96
    %v437 = vunpack.c.h.b16 %v96
    %v438 = vunpack.c.l.b16 %v97
    %v439 = vunpack.c.l.b16 %v98
    %v440 = vunpack.c.h.b16 %v98
    %v441 = vunpack.c.l.b16 %v99
    %v442 = vunpack.c.h.b16 %v99
    %v443 = vunpack.c.l.b16 %v100
    %v444 = vunpack.c.l.b16 %v101
    %v445 = vunpack.c.h.b16 %v101
    %v446 = vunpack.c.l.b16 %v102
    %v447 = vunpack.c.h.b16 %v102
    %v448 = vunpack.c.l.b16 %v103
    %v449 = vunpack.c.l.b16 %v104
    %v450 = vunpack.c.h.b16 %v104
    %v451 = vunpack.c.l.b16 %v105
    %v452 = vunpack.c.h.b16 %v105
    %v453 = vunpack.c.l.b16 %v106
    %v454 = vunpack.c.l.b16 %v107
    %v455 = vunpack.c.h.b16 %v107
    %v456 = vunpack.c.l.b16 %v108
    %v457 = vunpack.c.h.b16 %v108
    %v458 = vunpack.c.l.b16 %v109
    %v459 = vunpack.c.l.b16 %v110
    %v460 = vunpack.c.h.b16 %v110
    %v461 = vunpack.c.l.b16 %v111
    %v462 = vunpack.c.h.b16 %v111
    %v463 = vunpack.c.l.b16 %v112
    %v464 = vunpack.c.l.b16 %v113
    %v465 = vunpack.c.h.b16 %v113
    %v466 = vunpack.c.l.b16 %v114
    %v467 = vunpack.c.h.b16 %v114
    %v468 = vunpack.c.l.b16 %v115
    %v469 = vunpack.c.l.b16 %v116
    %v470 = vunpack.c.h.b16 %v116
    %v471 = vunpack.c.l.b16 %v117
    %v472 = vunpack.c.h.b16 %v117
    %v473 = vunpack.c.l.b16 %v118
    %v474 = vunpack.c.l.b16 %v119
    %v475 = vunpack.c.h.b16 %v119
    %v476 = vunpack.c.l.b16 %v120
    %v477 = vunpack.c.h.b16 %v120
    %v478 = vunpack.c.l.b16 %v121
    %v479 = vunpack.c.l.b16 %v122
    %v480 = vunpack.c.h.b16 %v122
    %v481 = vunpack.c.l.b16 %v123
    %v482 = vunpack.c.h.b16 %v123
    %v483 = vunpack.c.l.b16 %v124
    %v484 = vunpack.c.l.b16 %v125
    %v485 = vunpack.c.h.b16 %v125
    %v486 = vunpack.c.l.b16 %v126
    %v487 = vunpack.c.h.b16 %v126
    %v488 = vunpack.c.l.b16 %v127
    %v489 = vunpack.c.l.b16 %v128
    %v490 = vunpack.c.h.b16 %v128
    %v491 = vunpack.c.l.b16 %v129
    %v492 = vunpack.c.h.b16 %v129
    %v493 = vunpack.c.l.b16 %v130
    %v494 = vunpack.c.l.b16 %v131
    %v495 = vunpack.c.h.b16 %v131
    %v496 = vunpack.c.l.b16 %v132
    %v497 = vunpack.c.h.b16 %v132
    %v498 = vunpack.c.l.b16 %v133
    %v499 = vunpack.c.l.b16 %v134
    %v500 = vunpack.c.h.b16 %v134
    %v501 = vunpack.c.l.b16 %v135
    %v502 = vunpack.c.h.b16 %v135
    %v503 = vunpack.c.l.b16 %v136
    %v504 = vunpack.c.l.b16 %v137
    %v505 = vunpack.c.h.b16 %v137
    %v506 = vunpack.c.l.b16 %v138
    %v507 = vunpack.c.h.b16 %v138
    %v508 = vunpack.c.l.b16 %v139
    %v509 = vunpack.c.l.b16 %v140
    %v510 = vunpack.c.h.b16 %v140
    %v511 = vunpack.c.l.b16 %v141
    %v512 = vunpack.c.h.b16 %v141
    %v513 = vunpack.c.l.b16 %v142
    %v514 = vunpack.c.l.b16 %v143
    %v515 = vunpack.c.h.b16 %v143
    %v516 = vunpack.c.l.b16 %v144
    %v517 = vunpack.c.h.b16 %v144
    %v518 = vunpack.c.l.b16 %v145
    %v519 = vunpack.c.l.b16 %v146
    %v520 = vunpack.c.h.b16 %v146
    %v521 = vunpack.c.l.b16 %v147
    %v522 = vunpack.c.h.b16 %v147
    %v523 = vunpack.c.l.b16 %v148
    %v524 = vunpack.c.l.b16 %v149
    %v525 = vunpack.c.h.b16 %v149
    %v526 = vunpack.c.l.b16 %v150
    %v527 = vunpack.c.h.b16 %v150
    %v528 = vunpack.c.l.b16 %v151
    %v529 = vunpack.c.l.b16 %v152
    %v530 = vunpack.c.h.b16 %v152
    %v531 = vunpack.c.l.b16 %v153
    %v532 = vunpack.c.h.b16 %v153
    %v533 = vunpack.c.l.b16 %v154
    %v534 = vunpack.c.l.b16 %v155
    %v535 = vunpack.c.h.b16 %v155
    %v536 = vunpack.c.l.b16 %v156
    %v537 = vunpack.c.h.b16 %v156
    %v538 = vunpack.c.l.b16 %v157
    %v539 = vunpack.c.l.b16 %v158
    %v540 = vunpack.c.h.b16 %v158
    %v541 = vunpack.c.l.b16 %v159
    %v542 = vunpack.c.h.b16 %v159
    %v543 = vunpack.c.l.b16 %v160
    %v544 = vunpack.c.l.b16 %v161
    %v545 = vunpack.c.h.b16 %v161
    %v546 = vunpack.c.l.b16 %v162
    %v547 = vunpack.c.h.b16 %v162
    %v548 = vunpack.c.l.b16 %v163
    %v549 = vunpack.c.l.b16 %v164
    %v550 = vunpack.c.h.b16 %v164
    %v551 = vunpack.c.l.b16 %v165
    %v552 = vunpack.c.h.b16 %v165
    %v553 = vunpack.c.l.b16 %v166
    %v554 = vunpack.c.l.b16 %v167
    %v555 = vunpack.c.h.b16 %v167
    %v556 = vunpack.c.l.b16 %v168
    %v557 = vunpack.c.h.b16 %v168
    %v558 = vunpack.c.l.b16 %v169
    %v559 = vunpack.c.l.b16 %v170
    %v560 = vunpack.c.h.b16 %v170
    %v561 = vunpack.c.l.b16 %v171
    %v562 = vunpack.c.h.b16 %v171
    %v563 = vunpack.c.l.b16 %v172
    %v564 = vunpack.c.l.b16 %v173
    %v565 = vunpack.c.h.b16 %v173
    %v566 = vunpack.c.l.b16 %v174
    %v567 = vunpack.c.h.b16 %v174
    %v568 = vunpack.c.l.b16 %v175
    %v569 = vunpack.c.l.b16 %v176
    %v570 = vunpack.c.h.b16 %v176
    %v571 = vunpack.c.l.b16 %v177
    %v572 = vunpack.c.h.b16 %v177
    %v573 = vunpack.c.l.b16 %v178
    %v574 = vpack.c.b16 %v339, %v334
    %v575 = vpack.c.b16 %v340, %v335
    %v576 = vpack.c.b16 %v341, %v336
    %v577 = vpack.c.b16 %v342, %v337
    %v578 = vpack.c.b16 %v343, %v338
    %v579 = vpack.c.b16 %v349, %v344
    %v580 = vpack.c.b16 %v350, %v345
    %v581 = vpack.c.b16 %v351, %v346
    %v582 = vpack.c.b16 %v352, %v347
    %v583 = vpack.c.b16 %v353, %v348
    %v584 = vpack.c.b16 %v359, %v354
    %v585 = vpack.c.b16 %v360, %v355
    %v586 = vpack.c.b16 %v361, %v356
    %v587 = vpack.c.b16 %v362, %v357
    %v588 = vpack.c.b16 %v363, %v358
    %v589 = vpack.c.b16 %v369, %v364
    %v590 = vpack.c.b16 %v370, %v365
    %v591 = vpack.c.b16 %v371, %v366
    %v592 = vpack.c.b16 %v372, %v367
    %v593 = vpack.c.b16 %v373, %v368
    %v594 = vpack.c.b16 %v379, %v374
    %v595 = vpack.c.b16 %v380, %v375
    %v596 = vpack.c.b16 %v381, %v376
    %v597 = vpack.c.b16 %v382, %v377
    %v598 = vpack.c.b16 %v383, %v378
    %v599 = vpack.c.b16 %v389, %v384
    %v600 = vpack.c.b16 %v390, %v385
    %v601 = vpack.c.b16 %v391, %v386
    %v602 = vpack.c.b16 %v392, %v387
    %v603 = vpack.c.b16 %v393, %v388
    %v604 = vpack.c.b16 %v399, %v394
    %v605 = vpack.c.b16 %v400, %v395
    %v606 = vpack.c.b16 %v401, %v396
    %v607 = vpack.c.b16 %v402, %v397
    %v608 = vpack.c.b16 %v403, %v398
    %v609 = vpack.c.b16 %v409, %v404
    %v610 = vpack.c.b16 %v410, %v405
    %v611 = vpack.c.b16 %v411, %v406
    %v612 = vpack.c.b16 %v412, %v407
    %v613 = vpack.c.b16 %v413, %v408
    %v614 = vpack.c.b16 %v419, %v414
    %v615 = vpack.c.b16 %v420, %v415
    %v616 = vpack.c.b16 %v421, %v416
    %v617 = vpack.c.b16 %v422, %v417
    %v618 = vpack.c.b16 %v423, %v418
    %v619 = vpack.c.b16 %v429, %v424
    %v620 = vpack.c.b16 %v430, %v425
    %v621 = vpack.c.b16 %v431, %v426
    %v622 = vpack.c.b16 %v432, %v427
    %v623 = vpack.c.b16 %v433, %v428
    %v624 = vpack.c.b16 %v439, %v434
    %v625 = vpack.c.b16 %v440, %v435
    %v626 = vpack.c.b16 %v441, %v436
    %v627 = vpack.c.b16 %v442, %v437
    %v628 = vpack.c.b16 %v443, %v438
    %v629 = vpack.c.b16 %v449, %v444
    %v630 = vpack.c.b16 %v450, %v445
    %v631 = vpack.c.b16 %v451, %v446
    %v632 = vpack.c.b16 %v452, %v447
    %v633 = vpack.c.b16 %v453, %v448
    %v634 = vpack.c.b16 %v459, %v454
    %v635 = vpack.c.b16 %v460, %v455
    %v636 = vpack.c.b16 %v461, %v456
    %v637 = vpack.c.b16 %v462, %v457
    %v638 = vpack.c.b16 %v463, %v458
    %v639 = vpack.c.b16 %v469, %v464
    %v640 = vpack.c.b16 %v470, %v465
    %v641 = vpack.c.b16 %v471, %v466
    %v642 = vpack.c.b16 %v472, %v467
    %v643 = vpack.c.b16 %v473, %v468
    %v644 = vpack.c.b16 %v479, %v474
    %v645 = vpack.c.b16 %v480, %v475
    %v646 = vpack.c.b16 %v481, %v476
    %v647 = vpack.c.b16 %v482, %v477
    %v648 = vpack.c.b16 %v483, %v478
    %v649 = vpack.c.b16 %v489, %v484
    %v650 = vpack.c.b16 %v490, %v485
    %v651 = vpack.c.b16 %v491, %v486
    %v652 = vpack.c.b16 %v492, %v487
    %v653 = vpack.c.b16 %v493, %v488
    %v654 = vpack.c.b16 %v499, %v494
    %v655 = vpack.c.b16 %v500, %v495
    %v656 = vpack.c.b16 %v501, %v496
    %v657 = vpack.c.b16 %v502, %v497
    %v658 = vpack.c.b16 %v503, %v498
    %v659 = vpack.c.b16 %v509, %v504
    %v660 = vpack.c.b16 %v510, %v505
    %v661 = vpack.c.b16 %v511, %v506
    %v662 = vpack.c.b16 %v512, %v507
    %v663 = vpack.c.b16 %v513, %v508
    %v664 = vpack.c.b16 %v519, %v514
    %v665 = vpack.c.b16 %v520, %v515
    %v666 = vpack.c.b16 %v521, %v516
    %v667 = vpack.c.b16 %v522, %v517
    %v668 = vpack.c.b16 %v523, %v518
    %v669 = vpack.c.b16 %v529, %v524
    %v670 = vpack.c.b16 %v530, %v525
    %v671 = vpack.c.b16 %v531, %v526
    %v672 = vpack.c.b16 %v532, %v527
    %v673 = vpack.c.b16 %v533, %v528
    %v674 = vpack.c.b16 %v539, %v534
    %v675 = vpack.c.b16 %v540, %v535
    %v676 = vpack.c.b16 %v541, %v536
    %v677 = vpack.c.b16 %v542, %v537
    %v678 = vpack.c.b16 %v543, %v538
    %v679 = vpack.c.b16 %v549, %v544
    %v680 = vpack.c.b16 %v550, %v545
    %v681 = vpack.c.b16 %v551, %v546
    %v682 = vpack.c.b16 %v552, %v547
    %v683 = vpack.c.b16 %v553, %v548
    %v684 = vpack.c.b16 %v559, %v554
    %v685 = vpack.c.b16 %v560, %v555
    %v686 = vpack.c.b16 %v561, %v556
    %v687 = vpack.c.b16 %v562, %v557
    %v688 = vpack.c.b16 %v563, %v558
    %v689 = vpack.c.b16 %v569, %v564
    %v690 = vpack.c.b16 %v570, %v565
    %v691 = vpack.c.b16 %v571, %v566
    %v692 = vpack.c.b16 %v572, %v567
    %v693 = vpack.c.b16 %v573, %v568
    %814 = vmatprep.subr.bf16.mxu0 %v575
    %815 = vmatpush1.bf16.msra.mxu0 %v574
    %816 = vmatprep.subr.bf16.mxu0 %v580
    %817 = vmatpush1.bf16.msra.mxu0 %v579
    %818 = vmatprep.subr.bf16.mxu0 %v585
    %819 = vmatpush1.bf16.msra.mxu0 %v584
    %820 = vmatprep.subr.bf16.mxu0 %v590
    %821 = vmatpush1.bf16.msra.mxu0 %v589
    %822 = vmatprep.subr.bf16.mxu0 %v595
    %823 = vmatpush1.bf16.msra.mxu0 %v594
    %824 = vmatprep.subr.bf16.mxu0 %v600
    %825 = vmatpush1.bf16.msra.mxu0 %v599
    %826 = vmatprep.subr.bf16.mxu0 %v605
    %827 = vmatpush1.bf16.msra.mxu0 %v604
    %828 = vmatprep.subr.bf16.mxu0 %v610
    %829 = vmatpush1.bf16.msra.mxu0 %v609
    %830 = vmatprep.subr.bf16.mxu0 %v615
    %831 = vmatpush1.bf16.msra.mxu0 %v614
    %832 = vmatprep.subr.bf16.mxu0 %v620
    %833 = vmatpush1.bf16.msra.mxu0 %v619
    %834 = vmatprep.subr.bf16.mxu0 %v625
    %835 = vmatpush1.bf16.msra.mxu0 %v624
    %836 = vmatprep.subr.bf16.mxu0 %v630
    %837 = vmatpush1.bf16.msra.mxu0 %v629
    %838 = vmatprep.subr.bf16.mxu0 %v635
    %839 = vmatpush1.bf16.msra.mxu0 %v634
    %840 = vmatprep.subr.bf16.mxu0 %v640
    %841 = vmatpush1.bf16.msra.mxu0 %v639
    %842 = vmatprep.subr.bf16.mxu0 %v645
    %843 = vmatpush1.bf16.msra.mxu0 %v644
    %844 = vmatprep.subr.bf16.mxu0 %v650
    %845 = vmatpush1.bf16.msra.mxu0 %v649
    %846 = vmatprep.mubr.bf16.mxu0 %v185
    %847 = vmatmul.mubr.bf16.gmra.mrb[0].mxu0 %v184
    %v848 = vpop.f32.mrb[0].mxu0
    %v849 = vadd.f32 0.0, %v848
    %v850 = vpop.f32.mrb[0].mxu0
    %v851 = vadd.f32 0.0, %v850
    %v852 = vpop.f32.mrb[0].mxu0
    %v853 = vpop.f32.mrb[0].mxu0
    %854 = vdwg.mxu0
    %855 = vmatprep.subr.bf16.mxu0 %v655
    %856 = vmatpush1.bf16.msra.mxu0 %v654
    %857 = vmatprep.subr.bf16.mxu0 %v660
    %858 = vmatpush1.bf16.msra.mxu0 %v659
    %859 = vmatprep.subr.bf16.mxu0 %v665
    %860 = vmatpush1.bf16.msra.mxu0 %v664
    %861 = vmatprep.subr.bf16.mxu0 %v670
    %862 = vmatpush1.bf16.msra.mxu0 %v669
    %863 = vmatprep.subr.bf16.mxu0 %v675
    %864 = vmatpush1.bf16.msra.mxu0 %v674
    %865 = vmatprep.subr.bf16.mxu0 %v680
    %866 = vmatpush1.bf16.msra.mxu0 %v679
    %867 = vmatprep.subr.bf16.mxu0 %v685
    %868 = vmatpush1.bf16.msra.mxu0 %v684
    %869 = vmatprep.subr.bf16.mxu0 %v690
    %870 = vmatpush1.bf16.msra.mxu0 %v689
    %871 = vmatprep.subr.bf16.mxu0 0
    %872 = vmatpush1.bf16.msra.mxu0 0
    %873 = vmatprep.subr.bf16.mxu0 0
    %874 = vmatpush1.bf16.msra.mxu0 0
    %875 = vmatprep.subr.bf16.mxu0 0
    %876 = vmatpush1.bf16.msra.mxu0 0
    %877 = vmatprep.subr.bf16.mxu0 0
    %878 = vmatpush1.bf16.msra.mxu0 0
    %879 = vmatprep.subr.bf16.mxu0 0
    %880 = vmatpush1.bf16.msra.mxu0 0
    %881 = vmatprep.subr.bf16.mxu0 0
    %882 = vmatpush1.bf16.msra.mxu0 0
    %883 = vmatprep.subr.bf16.mxu0 0
    %884 = vmatpush1.bf16.msra.mxu0 0
    %885 = vmatprep.subr.bf16.mxu0 0
    %886 = vmatpush1.bf16.msra.mxu0 0
    %887 = vmatprep.mubr.bf16.mxu0 0
    %888 = vmatmul.mubr.bf16.gmra.mrb[0].mxu0 %v186
    %v889 = vpop.f32.mrb[0].mxu0
    %v890 = vadd.f32 %v849, %v889
    %v891 = vpop.f32.mrb[0].mxu0
    %v892 = vadd.f32 %v851, %v891
    %v893 = vpop.f32.mrb[0].mxu0
    %v894 = vpop.f32.mrb[0].mxu0
    %895 = vdwg.mxu0
    %896 = vmatprep.subr.bf16.mxu0 %v577
    %897 = vmatpush1.bf16.msra.mxu0 %v576
    %898 = vmatprep.subr.bf16.mxu0 %v582
    %899 = vmatpush1.bf16.msra.mxu0 %v581
    %900 = vmatprep.subr.bf16.mxu0 %v587
    %901 = vmatpush1.bf16.msra.mxu0 %v586
    %902 = vmatprep.subr.bf16.mxu0 %v592
    %903 = vmatpush1.bf16.msra.mxu0 %v591
    %904 = vmatprep.subr.bf16.mxu0 %v597
    %905 = vmatpush1.bf16.msra.mxu0 %v596
    %906 = vmatprep.subr.bf16.mxu0 %v602
    %907 = vmatpush1.bf16.msra.mxu0 %v601
    %908 = vmatprep.subr.bf16.mxu0 %v607
    %909 = vmatpush1.bf16.msra.mxu0 %v606
    %910 = vmatprep.subr.bf16.mxu0 %v612
    %911 = vmatpush1.bf16.msra.mxu0 %v611
    %912 = vmatprep.subr.bf16.mxu0 %v617
    %913 = vmatpush1.bf16.msra.mxu0 %v616
    %914 = vmatprep.subr.bf16.mxu0 %v622
    %915 = vmatpush1.bf16.msra.mxu0 %v621
    %916 = vmatprep.subr.bf16.mxu0 %v627
    %917 = vmatpush1.bf16.msra.mxu0 %v626
    %918 = vmatprep.subr.bf16.mxu0 %v632
    %919 = vmatpush1.bf16.msra.mxu0 %v631
    %920 = vmatprep.subr.bf16.mxu0 %v637
    %921 = vmatpush1.bf16.msra.mxu0 %v636
    %922 = vmatprep.subr.bf16.mxu0 %v642
    %923 = vmatpush1.bf16.msra.mxu0 %v641
    %924 = vmatprep.subr.bf16.mxu0 %v647
    %925 = vmatpush1.bf16.msra.mxu0 %v646
    %926 = vmatprep.subr.bf16.mxu0 %v652
    %927 = vmatpush1.bf16.msra.mxu0 %v651
    %928 = vmatprep.mubr.bf16.mxu0 %v185
    %929 = vmatmul.mubr.bf16.gmra.mrb[0].mxu0 %v184
    %v930 = vpop.f32.mrb[0].mxu0
    %v931 = vadd.f32 0.0, %v930
    %v932 = vpop.f32.mrb[0].mxu0
    %v933 = vadd.f32 0.0, %v932
    %v934 = vpop.f32.mrb[0].mxu0
    %v935 = vpop.f32.mrb[0].mxu0
    %936 = vdwg.mxu0
    %937 = vmatprep.subr.bf16.mxu0 %v657
    %938 = vmatpush1.bf16.msra.mxu0 %v656
    %939 = vmatprep.subr.bf16.mxu0 %v662
    %940 = vmatpush1.bf16.msra.mxu0 %v661
    %941 = vmatprep.subr.bf16.mxu0 %v667
    %942 = vmatpush1.bf16.msra.mxu0 %v666
    %943 = vmatprep.subr.bf16.mxu0 %v672
    %944 = vmatpush1.bf16.msra.mxu0 %v671
    %945 = vmatprep.subr.bf16.mxu0 %v677
    %946 = vmatpush1.bf16.msra.mxu0 %v676
    %947 = vmatprep.subr.bf16.mxu0 %v682
    %948 = vmatpush1.bf16.msra.mxu0 %v681
    %949 = vmatprep.subr.bf16.mxu0 %v687
    %950 = vmatpush1.bf16.msra.mxu0 %v686
    %951 = vmatprep.subr.bf16.mxu0 %v692
    %952 = vmatpush1.bf16.msra.mxu0 %v691
    %953 = vmatprep.subr.bf16.mxu0 0
    %954 = vmatpush1.bf16.msra.mxu0 0
    %955 = vmatprep.subr.bf16.mxu0 0
    %956 = vmatpush1.bf16.msra.mxu0 0
    %957 = vmatprep.subr.bf16.mxu0 0
    %958 = vmatpush1.bf16.msra.mxu0 0
    %959 = vmatprep.subr.bf16.mxu0 0
    %960 = vmatpush1.bf16.msra.mxu0 0
    %961 = vmatprep.subr.bf16.mxu0 0
    %962 = vmatpush1.bf16.msra.mxu0 0
    %963 = vmatprep.subr.bf16.mxu0 0
    %964 = vmatpush1.bf16.msra.mxu0 0
    %965 = vmatprep.subr.bf16.mxu0 0
    %966 = vmatpush1.bf16.msra.mxu0 0
    %967 = vmatprep.subr.bf16.mxu0 0
    %968 = vmatpush1.bf16.msra.mxu0 0
    %969 = vmatprep.mubr.bf16.mxu0 0
    %970 = vmatmul.mubr.bf16.gmra.mrb[0].mxu0 %v186
    %v971 = vpop.f32.mrb[0].mxu0
    %v972 = vadd.f32 %v931, %v971
    %v973 = vpop.f32.mrb[0].mxu0
    %v974 = vadd.f32 %v933, %v973
    %v975 = vpop.f32.mrb[0].mxu0
    %v976 = vpop.f32.mrb[0].mxu0
    %977 = vdwg.mxu0
    %978 = vmatprep.subr.bf16.mxu0 0
    %979 = vmatpush1.bf16.msra.mxu0 %v578
    %980 = vmatprep.subr.bf16.mxu0 0
    %981 = vmatpush1.bf16.msra.mxu0 %v583
    %982 = vmatprep.subr.bf16.mxu0 0
    %983 = vmatpush1.bf16.msra.mxu0 %v588
    %984 = vmatprep.subr.bf16.mxu0 0
    %985 = vmatpush1.bf16.msra.mxu0 %v593
    %986 = vmatprep.subr.bf16.mxu0 0
    %987 = vmatpush1.bf16.msra.mxu0 %v598
    %988 = vmatprep.subr.bf16.mxu0 0
    %989 = vmatpush1.bf16.msra.mxu0 %v603
    %990 = vmatprep.subr.bf16.mxu0 0
    %991 = vmatpush1.bf16.msra.mxu0 %v608
    %992 = vmatprep.subr.bf16.mxu0 0
    %993 = vmatpush1.bf16.msra.mxu0 %v613
    %994 = vmatprep.subr.bf16.mxu0 0
    %995 = vmatpush1.bf16.msra.mxu0 %v618
    %996 = vmatprep.subr.bf16.mxu0 0
    %997 = vmatpush1.bf16.msra.mxu0 %v623
    %998 = vmatprep.subr.bf16.mxu0 0
    %999 = vmatpush1.bf16.msra.mxu0 %v628
    %1000 = vmatprep.subr.bf16.mxu0 0
    %1001 = vmatpush1.bf16.msra.mxu0 %v633
    %1002 = vmatprep.subr.bf16.mxu0 0
    %1003 = vmatpush1.bf16.msra.mxu0 %v638
    %1004 = vmatprep.subr.bf16.mxu0 0
    %1005 = vmatpush1.bf16.msra.mxu0 %v643
    %1006 = vmatprep.subr.bf16.mxu0 0
    %1007 = vmatpush1.bf16.msra.mxu0 %v648
    %1008 = vmatprep.subr.bf16.mxu0 0
    %1009 = vmatpush1.bf16.msra.mxu0 %v653
    %1010 = vmatprep.mubr.bf16.mxu0 %v185
    %1011 = vmatmul.mubr.bf16.gmra.mrb[0].mxu0 %v184
    %v1012 = vpop.f32.mrb[0].mxu0
    %v1013 = vadd.f32 0.0, %v1012
    %v1014 = vpop.f32.mrb[0].mxu0
    %v1015 = vpop.f32.mrb[0].mxu0
    %v1016 = vpop.f32.mrb[0].mxu0
    %1017 = vdwg.mxu0
    %1018 = vmatprep.subr.bf16.mxu0 0
    %1019 = vmatpush1.bf16.msra.mxu0 %v658
    %1020 = vmatprep.subr.bf16.mxu0 0
    %1021 = vmatpush1.bf16.msra.mxu0 %v663
    %1022 = vmatprep.subr.bf16.mxu0 0
    %1023 = vmatpush1.bf16.msra.mxu0 %v668
    %1024 = vmatprep.subr.bf16.mxu0 0
    %1025 = vmatpush1.bf16.msra.mxu0 %v673
    %1026 = vmatprep.subr.bf16.mxu0 0
    %1027 = vmatpush1.bf16.msra.mxu0 %v678
    %1028 = vmatprep.subr.bf16.mxu0 0
    %1029 = vmatpush1.bf16.msra.mxu0 %v683
    %1030 = vmatprep.subr.bf16.mxu0 0
    %1031 = vmatpush1.bf16.msra.mxu0 %v688
    %1032 = vmatprep.subr.bf16.mxu0 0
    %1033 = vmatpush1.bf16.msra.mxu0 %v693
    %1034 = vmatprep.subr.bf16.mxu0 0
    %1035 = vmatpush1.bf16.msra.mxu0 0
    %1036 = vmatprep.subr.bf16.mxu0 0
    %1037 = vmatpush1.bf16.msra.mxu0 0
    %1038 = vmatprep.subr.bf16.mxu0 0
    %1039 = vmatpush1.bf16.msra.mxu0 0
    %1040 = vmatprep.subr.bf16.mxu0 0
    %1041 = vmatpush1.bf16.msra.mxu0 0
    %1042 = vmatprep.subr.bf16.mxu0 0
    %1043 = vmatpush1.bf16.msra.mxu0 0
    %1044 = vmatprep.subr.bf16.mxu0 0
    %1045 = vmatpush1.bf16.msra.mxu0 0
    %1046 = vmatprep.subr.bf16.mxu0 0
    %1047 = vmatpush1.bf16.msra.mxu0 0
    %1048 = vmatprep.subr.bf16.mxu0 0
    %1049 = vmatpush1.bf16.msra.mxu0 0
    %1050 = vmatprep.mubr.bf16.mxu0 0
    %1051 = vmatmul.mubr.bf16.gmra.mrb[0].mxu0 %v186
    %v1052 = vpop.f32.mrb[0].mxu0
    %v1053 = vadd.f32 %v1013, %v1052
    %v1054 = vpop.f32.mrb[0].mxu0
    %v1055 = vpop.f32.mrb[0].mxu0
    %v1056 = vpop.f32.mrb[0].mxu0
    %1057 = vdwg.mxu0
    %v1058 = vld [vmem:[%s2] sm:$0xff]
    %1060 = vset.pattern.permute.xlu0 0
    %1061 = vperm.xlu0 %1060, %v1058
    %v1062 = vpop.permute.xlu0 %1061
    %v1064 = vmul.f32 %v890, %v1062
    %v1065 = vmul.f32 %v892, %v1062
    %v1066 = vmul.f32 %v972, %v1062
    %v1067 = vmul.f32 %v974, %v1062
    %v1068 = vmul.f32 %v1053, %v1062
    %v1069 = vld [vmem:[%s3] sm:$0xff]
    %1071 = vset.pattern.permute.xlu0 0
    %1072 = vperm.xlu0 %1071, %v1069
    %v1073 = vpop.permute.xlu0 %1072
    %v1075 = vadd.f32 %v1064, %v1073
    %v1076 = vadd.f32 %v1065, %v1073
    %v1077 = vadd.f32 %v1066, %v1073
    %v1078 = vadd.f32 %v1067, %v1073
    %v1079 = vadd.f32 %v1068, %v1073
    %v1080 = vmax.f32 %v1075, 0.0
    %v1081 = vmax.f32 %v1076, 0.0
    %v1082 = vmax.f32 %v1077, 0.0
    %v1083 = vmax.f32 %v1078, 0.0
    %v1084 = vmax.f32 %v1079, 0.0
    %1085 = vst [vmem:[#allocation5] sm:$0xff] %v1080
    %1086 = vst [vmem:[#allocation5 + $0x8] sm:$0xff] %v1081
    %1087 = vst [vmem:[#allocation5 + $0x10] sm:$0xff] %v1082
    %1088 = vst [vmem:[#allocation5 + $0x18] sm:$0xff] %v1083
    %1089 = vst [vmem:[#allocation5 + $0x20] sm:$0xff] %v1084
    // Predicated region
    $region22: #{tpu_custom_call.1} parent=1 // pred_check
      _
    $region23: #{tpu_custom_call.1} parent=1 // pred_check_branch
      %1091 = sbr.rel (0) target = $region25
    $region24: #{tpu_custom_call.1} parent=1 // pred_region
      %s1093 = ssub.s32 640, 640
      %1094 = vsyncadd [#allocation4], %s1093
      %s1096 = sshll.u32 [#allocation5], 4
      %s1097 = int_to_ptr.vmem [resolvable:$true] %s1096
      %1099 = dma.vmem_to_hbm [thread:$0]  %s1097, 640, %s4, [#allocation4]
    $region25: #{tpu_custom_call.1} parent=1 // pred_fallthru
      _
    // Predicated region
    $region26: #{tpu_custom_call.1} parent=1 // pred_check
      _
    $region27: #{tpu_custom_call.1} parent=1 // pred_check_branch
      %1101 = sbr.rel (0) target = $region29
    $region28: #{tpu_custom_call.1} parent=1 // pred_region
      %1102 = dma.done [#allocation4], 640
    $region29: #{tpu_custom_call.1} parent=1 // pred_fallthru
      _
    %1103 = vsyncpa [#allocation3], 1
    %1104 = vsyncpa [#allocation4], 1

</llo_original>
